<compile_context>
chip_gen: v5e
topology: v5e:2x2
jax: 0.10.0
libtpu: 0.0.40
codegen_flags: <defaults>
</compile_context>

<pallas_src>
import jax
import jax.numpy as jnp
from jax.experimental import pallas as pl
from jax.experimental.pallas import tpu as pltpu


def se_conv1x1_kernel(gate_ref, w_ref, x_ref, o_ref):
    # gate_ref: (1, Cin)      -- SE gate logits
    # w_ref   : (Cout, Cin)   -- full 1x1 conv weight
    # x_ref   : (Cin, M)      -- activations, channels-first
    # o_ref   : (Cout, M)
    g = jax.nn.sigmoid(gate_ref[...])          # EUP, 120 elems, negligible
    ws = w_ref[...] * g                        # fold gate into weight rows (VPU)
    o_ref[...] = jnp.dot(
        ws, x_ref[...], preferred_element_type=jnp.float32
    ).astype(o_ref.dtype)


def se_mul_conv1x1(x_nchw, gate_nc11, weight_oi11):
    """out = Conv1x1(sigmoid(gate) * x), bias-free. NCHW in / NCHW out."""
    N, C, H, W = x_nchw.shape
    Cout = weight_oi11.shape[0]
    # TODO(synk): kernel assumes batch 1 (matches the module's trace shapes);
    # N > 1 would need a per-batch gate and a batched grid axis.
    assert N == 1, "kernel assumes batch 1"

    M = H * W
    x2d = x_nchw.reshape(C, M)            # free (contiguous NCHW)
    gate2d = gate_nc11.reshape(1, C)      # free
    w2d = weight_oi11.reshape(Cout, C)    # free

    out2d = pl.pallas_call(
        se_conv1x1_kernel,
        out_shape=jax.ShapeDtypeStruct((Cout, M), x_nchw.dtype),
        grid=(1,),
        in_specs=[
            pl.BlockSpec((1, C), lambda i: (0, 0)),       # gate (whole array)
            pl.BlockSpec((Cout, C), lambda i: (0, 0)),    # weight (whole array)
            pl.BlockSpec((C, M), lambda i: (0, 0)),       # x (whole array)
        ],
        out_specs=pl.BlockSpec((Cout, M), lambda i: (0, 0)),
        cost_estimate=pl.CostEstimate(
            flops=2 * M * C * Cout,
            transcendentals=C,
            bytes_accessed=4 * (C * M + Cout * C + Cout * M + C)),
    )(gate2d, w2d, x2d)

    return out2d.reshape(N, Cout, H, W)   # free (contiguous)


if __name__ == "__main__":
    key = jax.random.PRNGKey(0)
    k1, k2, k3 = jax.random.split(key, 3)

    N, C, H, W = 1, 120, 28, 28
    Cout = 120

    x77 = jax.random.normal(k1, (N, C, H, W), dtype=jnp.float32)   # activations
    x81 = jax.random.normal(k2, (N, C, 1, 1), dtype=jnp.float32)   # SE gate logits
    # Conv2d(120, 120, kernel_size=1, bias=False) weight
    conv_w = jax.random.normal(k3, (Cout, C, 1, 1), dtype=jnp.float32) * 0.05

    out = se_mul_conv1x1(x77, x81, conv_w)
    out = jax.block_until_ready(out)

    # reference check in plain JAX
    gated = jax.nn.sigmoid(x81) * x77
    ref = jax.lax.conv_general_dilated(
        gated, conv_w, window_strides=(1, 1), padding="VALID",
        dimension_numbers=("NCHW", "OIHW", "NCHW"))
    assert out.shape == (N, Cout, H, W)
    assert jnp.allclose(out, ref, atol=1e-4, rtol=1e-4), "mismatch vs reference"

    print("KERNEL_OK")
</pallas_src>

<mosaic_0001>
module attributes {stable_mosaic.version = 11 : i64} {
  func.func @se_conv1x1_kernel(%arg0: i32, %arg1: memref<1x120xf32, #tpu.memory_space<vmem>>, %arg2: memref<120x120xf32, #tpu.memory_space<vmem>>, %arg3: memref<120x784xf32, #tpu.memory_space<vmem>>, %arg4: memref<120x784xf32, #tpu.memory_space<vmem>>) attributes {dimension_semantics = [#tpu.dimension_semantics<arbitrary>], iteration_bounds = array<i64: 1>, scalar_prefetch = 0 : i64, scratch_operands = 0 : i64, tpu.core_type = #tpu.core_type<tc>, window_params = [{pipeline_mode = #tpu.pipeline_mode<synchronous>, transform_indices = @transform_0, window_bounds = array<i64: 1, 120>}, {pipeline_mode = #tpu.pipeline_mode<synchronous>, transform_indices = @transform_1, window_bounds = array<i64: 120, 120>}, {pipeline_mode = #tpu.pipeline_mode<synchronous>, transform_indices = @transform_2, window_bounds = array<i64: 120, 784>}, {pipeline_mode = #tpu.pipeline_mode<synchronous>, transform_indices = @transform_3, window_bounds = array<i64: 120, 784>}]} {
    %c0 = arith.constant 0 : index
    %c0_0 = arith.constant 0 : index
    %0 = vector.load %arg1[%c0, %c0_0] : memref<1x120xf32, #tpu.memory_space<vmem>>, vector<1x120xf32>
    %1 = arith.negf %0 : vector<1x120xf32>
    %2 = math.exp %1 : vector<1x120xf32>
    %cst = arith.constant 1.000000e+00 : f32
    %3 = vector.broadcast %cst : f32 to vector<1x120xf32>
    %4 = arith.addf %3, %2 : vector<1x120xf32>
    %5 = arith.divf %3, %4 : vector<1x120xf32>
    %c0_1 = arith.constant 0 : index
    %c0_2 = arith.constant 0 : index
    %6 = vector.load %arg2[%c0_1, %c0_2] : memref<120x120xf32, #tpu.memory_space<vmem>>, vector<120x120xf32>
    %7 = vector.broadcast %5 : vector<1x120xf32> to vector<120x120xf32>
    %8 = arith.mulf %6, %7 : vector<120x120xf32>
    %c0_3 = arith.constant 0 : index
    %c0_4 = arith.constant 0 : index
    %9 = vector.load %arg3[%c0_3, %c0_4] : memref<120x784xf32, #tpu.memory_space<vmem>>, vector<120x784xf32>
    %cst_5 = arith.constant dense<0.000000e+00> : vector<120x784xf32>
    %10 = tpu.matmul %8, %9, %cst_5 {dimension_numbers = #tpu.dot_dimension_numbers<[1], [0], [0], [1], [0, 0, 1, 1], [], []>} : vector<120x120xf32>, vector<120x784xf32>, vector<120x784xf32> -> vector<120x784xf32>
    %c0_6 = arith.constant 0 : index
    %c0_7 = arith.constant 0 : index
    %11 = vector.load %arg4[%c0_6, %c0_7] : memref<120x784xf32, #tpu.memory_space<vmem>>, vector<120x784xf32>
    tpu.vector_store %arg4[%c0_6, %c0_7], %10 {strides = array<i32>} : memref<120x784xf32, #tpu.memory_space<vmem>>, vector<120x784xf32>,
    return
  }
  func.func @transform_0(%arg0: i32) -> (i32, i32) {
    %c0_i32 = arith.constant 0 : i32
    %c0_i32_0 = arith.constant 0 : i32
    %c0_i32_1 = arith.constant 0 : i32
    return %c0_i32, %c0_i32_0 : i32, i32
  }
  func.func @transform_1(%arg0: i32) -> (i32, i32) {
    %c0_i32 = arith.constant 0 : i32
    %c0_i32_0 = arith.constant 0 : i32
    %c0_i32_1 = arith.constant 0 : i32
    return %c0_i32, %c0_i32_0 : i32, i32
  }
  func.func @transform_2(%arg0: i32) -> (i32, i32) {
    %c0_i32 = arith.constant 0 : i32
    %c0_i32_0 = arith.constant 0 : i32
    %c0_i32_1 = arith.constant 0 : i32
    return %c0_i32, %c0_i32_0 : i32, i32
  }
  func.func @transform_3(%arg0: i32) -> (i32, i32) {
    %c0_i32 = arith.constant 0 : i32
    %c0_i32_0 = arith.constant 0 : i32
    %c0_i32_1 = arith.constant 0 : i32
    return %c0_i32, %c0_i32_0 : i32, i32
  }
}

</mosaic_0001>

<llo_original>
// kernel: tpu_custom_call.1
$region0: #{tpu_custom_call.1}
  #allocation0 [shape = 'u32[]', space=smem, size = 0x4, offset = 0x4, fixed_abs, tag = 'smem constant byte address 0x4 - core index']
  #allocation1 [shape = 'u32[72,128]{1,0:T(1,128)}', space=vmem, size = 0x9000, scoped, tag = 'internal scratch']
  %s0 = inlined_call_operand.vmem [shape: f32[1,120], index: 0, kind: input, shape index: {}]
  %s1 = inlined_call_operand.vmem [shape: f32[120,120], index: 1, kind: input, shape index: {}]
  %s2 = inlined_call_operand.vmem [shape: f32[120,784], index: 2, kind: input, shape index: {}]
  %s3 = inlined_call_operand.vmem [shape: f32[120,784], index: 3, kind: output, shape index: {}]
  %s4 = sld [smem:[#allocation0]]
  $region22: #{tpu_custom_call.1} parent=0
    _
  %s6 = ssub.s32 1, %s4
  %s7 = scalar_select 0, %s6, %s4
  // Predicated region
  $region2: #{tpu_custom_call.1} parent=0 // pred_check
    _
  $region3: #{tpu_custom_call.1} parent=0 // pred_check_branch
    %9 = sbr.rel (0) target = $region5
  $region4: #{tpu_custom_call.1} parent=0 // pred_region
    _
  $region5: #{tpu_custom_call.1} parent=0 // pred_fallthru
    _
  // Predicated region
  $region6: #{tpu_custom_call.1} parent=0 // pred_check
    _
  $region7: #{tpu_custom_call.1} parent=0 // pred_check_branch
    %11 = sbr.rel (0) target = $region9
  $region8: #{tpu_custom_call.1} parent=0 // pred_region
    _
  $region9: #{tpu_custom_call.1} parent=0 // pred_fallthru
    _
  // Predicated region
  $region10: #{tpu_custom_call.1} parent=0 // pred_check
    _
  $region11: #{tpu_custom_call.1} parent=0 // pred_check_branch
    %13 = sbr.rel (0) target = $region13
  $region12: #{tpu_custom_call.1} parent=0 // pred_region
    _
  $region13: #{tpu_custom_call.1} parent=0 // pred_fallthru
    _
  %v14 = vld [vmem:[%s0] sm:$0x1]
  %v15 = vxor.u32 %v14, 2147483648
  %v16 = vmul.f32 %v15, 1.442695
  %v17 = vpow.pop %v16
  %v18 = vadd.f32 %v17, 1.0
  %v19 = vrcp.pop %v18
  %v20 = vmul.f32 %v18, %v19
  %v21 = vsub.f32 1.0, %v20
  %v22 = vmul.f32 %v19, %v21
  %v23 = vadd.f32 %v19, %v22
  %vm24 = vweird.f32 %v18
  %vm25 = vweird.f32 %v19
  %vm26 = vmor %vm24, %vm25
  %v27 = vsel %vm26, %v19, %v23
  %v28 = vand.u32 2147483647, %v18
  %vm29 = vcmp.eq.f32.partialorder %v28, 8.507059e+37
  %v30 = vand.u32 %v18, 2147483648
  %v31 = vor.u32 1.1754944e-38, %v30
  %v32 = vsel %vm29, %v31, %v27
  %v33 = vmul.f32 1.0, %v32
  %v34 = vld [vmem:[%s1] sm:$0xff]
  %v35 = vld [vmem:[%s1 + $0x8] sm:$0xff]
  %v36 = vld [vmem:[%s1 + $0x10] sm:$0xff]
  %v37 = vld [vmem:[%s1 + $0x18] sm:$0xff]
  %v38 = vld [vmem:[%s1 + $0x20] sm:$0xff]
  %v39 = vld [vmem:[%s1 + $0x28] sm:$0xff]
  %v40 = vld [vmem:[%s1 + $0x30] sm:$0xff]
  %v41 = vld [vmem:[%s1 + $0x38] sm:$0xff]
  %v42 = vld [vmem:[%s1 + $0x40] sm:$0xff]
  %v43 = vld [vmem:[%s1 + $0x48] sm:$0xff]
  %v44 = vld [vmem:[%s1 + $0x50] sm:$0xff]
  %v45 = vld [vmem:[%s1 + $0x58] sm:$0xff]
  %v46 = vld [vmem:[%s1 + $0x60] sm:$0xff]
  %v47 = vld [vmem:[%s1 + $0x68] sm:$0xff]
  %v48 = vld [vmem:[%s1 + $0x70] sm:$0xff]
  %v50 = vperm.slane %v33, 0
  %v52 = vmul.f32 %v34, %v50
  %v53 = vmul.f32 %v35, %v50
  %v54 = vmul.f32 %v36, %v50
  %v55 = vmul.f32 %v37, %v50
  %v56 = vmul.f32 %v38, %v50
  %v57 = vmul.f32 %v39, %v50
  %v58 = vmul.f32 %v40, %v50
  %v59 = vmul.f32 %v41, %v50
  %v60 = vmul.f32 %v42, %v50
  %v61 = vmul.f32 %v43, %v50
  %v62 = vmul.f32 %v44, %v50
  %v63 = vmul.f32 %v45, %v50
  %v64 = vmul.f32 %v46, %v50
  %v65 = vmul.f32 %v47, %v50
  %v66 = vmul.f32 %v48, %v50
  %v67 = vld [vmem:[%s2] sm:$0xff]
  %v68 = vld [vmem:[%s2 + $0x8] sm:$0xff]
  %v69 = vld [vmem:[%s2 + $0x10] sm:$0xff]
  %v70 = vld [vmem:[%s2 + $0x18] sm:$0xff]
  %v71 = vld [vmem:[%s2 + $0x20] sm:$0xff]
  %v72 = vld [vmem:[%s2 + $0x28] sm:$0xff]
  %v73 = vld [vmem:[%s2 + $0x30] sm:$0xff]
  %v74 = vld [vmem:[%s2 + $0x38] sm:$0xff]
  %v75 = vld [vmem:[%s2 + $0x40] sm:$0xff]
  %v76 = vld [vmem:[%s2 + $0x48] sm:$0xff]
  %v77 = vld [vmem:[%s2 + $0x50] sm:$0xff]
  %v78 = vld [vmem:[%s2 + $0x58] sm:$0xff]
  %v79 = vld [vmem:[%s2 + $0x60] sm:$0xff]
  %v80 = vld [vmem:[%s2 + $0x68] sm:$0xff]
  %v81 = vld [vmem:[%s2 + $0x70] sm:$0xff]
  %v82 = vld [vmem:[%s2 + $0x78] sm:$0xff]
  %v83 = vld [vmem:[%s2 + $0x80] sm:$0xff]
  %v84 = vld [vmem:[%s2 + $0x88] sm:$0xff]
  %v85 = vld [vmem:[%s2 + $0x90] sm:$0xff]
  %v86 = vld [vmem:[%s2 + $0x98] sm:$0xff]
  %v87 = vld [vmem:[%s2 + $0xa0] sm:$0xff]
  %v88 = vld [vmem:[%s2 + $0xa8] sm:$0xff]
  %v89 = vld [vmem:[%s2 + $0xb0] sm:$0xff]
  %v90 = vld [vmem:[%s2 + $0xb8] sm:$0xff]
  %v91 = vld [vmem:[%s2 + $0xc0] sm:$0xff]
  %v92 = vld [vmem:[%s2 + $0xc8] sm:$0xff]
  %v93 = vld [vmem:[%s2 + $0xd0] sm:$0xff]
  %v94 = vld [vmem:[%s2 + $0xd8] sm:$0xff]
  %v95 = vld [vmem:[%s2 + $0xe0] sm:$0xff]
  %v96 = vld [vmem:[%s2 + $0xe8] sm:$0xff]
  %v97 = vld [vmem:[%s2 + $0xf0] sm:$0xff]
  %v98 = vld [vmem:[%s2 + $0xf8] sm:$0xff]
  %v99 = vld [vmem:[%s2 + $0x100] sm:$0xff]
  %v100 = vld [vmem:[%s2 + $0x108] sm:$0xff]
  %v101 = vld [vmem:[%s2 + $0x110] sm:$0xff]
  %v102 = vld [vmem:[%s2 + $0x118] sm:$0xff]
  %v103 = vld [vmem:[%s2 + $0x120] sm:$0xff]
  %v104 = vld [vmem:[%s2 + $0x128] sm:$0xff]
  %v105 = vld [vmem:[%s2 + $0x130] sm:$0xff]
  %v106 = vld [vmem:[%s2 + $0x138] sm:$0xff]
  %v107 = vld [vmem:[%s2 + $0x140] sm:$0xff]
  %v108 = vld [vmem:[%s2 + $0x148] sm:$0xff]
  %v109 = vld [vmem:[%s2 + $0x150] sm:$0xff]
  %v110 = vld [vmem:[%s2 + $0x158] sm:$0xff]
  %v111 = vld [vmem:[%s2 + $0x160] sm:$0xff]
  %v112 = vld [vmem:[%s2 + $0x168] sm:$0xff]
  %v113 = vld [vmem:[%s2 + $0x170] sm:$0xff]
  %v114 = vld [vmem:[%s2 + $0x178] sm:$0xff]
  %v115 = vld [vmem:[%s2 + $0x180] sm:$0xff]
  %v116 = vld [vmem:[%s2 + $0x188] sm:$0xff]
  %v117 = vld [vmem:[%s2 + $0x190] sm:$0xff]
  %v118 = vld [vmem:[%s2 + $0x198] sm:$0xff]
  %v119 = vld [vmem:[%s2 + $0x1a0] sm:$0xff]
  %v120 = vld [vmem:[%s2 + $0x1a8] sm:$0xff]
  %v121 = vld [vmem:[%s2 + $0x1b0] sm:$0xff]
  %v122 = vld [vmem:[%s2 + $0x1b8] sm:$0xff]
  %v123 = vld [vmem:[%s2 + $0x1c0] sm:$0xff]
  %v124 = vld [vmem:[%s2 + $0x1c8] sm:$0xff]
  %v125 = vld [vmem:[%s2 + $0x1d0] sm:$0xff]
  %v126 = vld [vmem:[%s2 + $0x1d8] sm:$0xff]
  %v127 = vld [vmem:[%s2 + $0x1e0] sm:$0xff]
  %v128 = vld [vmem:[%s2 + $0x1e8] sm:$0xff]
  %v129 = vld [vmem:[%s2 + $0x1f0] sm:$0xff]
  %v130 = vld [vmem:[%s2 + $0x1f8] sm:$0xff]
  %v131 = vld [vmem:[%s2 + $0x200] sm:$0xff]
  %v132 = vld [vmem:[%s2 + $0x208] sm:$0xff]
  %v133 = vld [vmem:[%s2 + $0x210] sm:$0xff]
  %v134 = vld [vmem:[%s2 + $0x218] sm:$0xff]
  %v135 = vld [vmem:[%s2 + $0x220] sm:$0xff]
  %v136 = vld [vmem:[%s2 + $0x228] sm:$0xff]
  %v137 = vld [vmem:[%s2 + $0x230] sm:$0xff]
  %v138 = vld [vmem:[%s2 + $0x238] sm:$0xff]
  %v139 = vld [vmem:[%s2 + $0x240] sm:$0xff]
  %v140 = vld [vmem:[%s2 + $0x248] sm:$0xff]
  %v141 = vld [vmem:[%s2 + $0x250] sm:$0xff]
  %v142 = vld [vmem:[%s2 + $0x258] sm:$0xff]
  %v143 = vld [vmem:[%s2 + $0x260] sm:$0xff]
  %v144 = vld [vmem:[%s2 + $0x268] sm:$0xff]
  %v145 = vld [vmem:[%s2 + $0x270] sm:$0xff]
  %v146 = vld [vmem:[%s2 + $0x278] sm:$0xff]
  %v147 = vld [vmem:[%s2 + $0x280] sm:$0xff]
  %v148 = vld [vmem:[%s2 + $0x288] sm:$0xff]
  %v149 = vld [vmem:[%s2 + $0x290] sm:$0xff]
  %v150 = vld [vmem:[%s2 + $0x298] sm:$0xff]
  %v151 = vld [vmem:[%s2 + $0x2a0] sm:$0xff]
  %v152 = vld [vmem:[%s2 + $0x2a8] sm:$0xff]
  %v153 = vld [vmem:[%s2 + $0x2b0] sm:$0xff]
  %v154 = vld [vmem:[%s2 + $0x2b8] sm:$0xff]
  %v155 = vld [vmem:[%s2 + $0x2c0] sm:$0xff]
  %v156 = vld [vmem:[%s2 + $0x2c8] sm:$0xff]
  %v157 = vld [vmem:[%s2 + $0x2d0] sm:$0xff]
  %v158 = vld [vmem:[%s2 + $0x2d8] sm:$0xff]
  %v159 = vld [vmem:[%s2 + $0x2e0] sm:$0xff]
  %v160 = vld [vmem:[%s2 + $0x2e8] sm:$0xff]
  %v161 = vld [vmem:[%s2 + $0x2f0] sm:$0xff]
  %v162 = vld [vmem:[%s2 + $0x2f8] sm:$0xff]
  %v163 = vld [vmem:[%s2 + $0x300] sm:$0xff]
  %v164 = vld [vmem:[%s2 + $0x308] sm:$0xff]
  %v165 = vld [vmem:[%s2 + $0x310] sm:$0xff]
  %v166 = vld [vmem:[%s2 + $0x318] sm:$0xff]
  %v167 = vld [vmem:[%s2 + $0x320] sm:$0xff]
  %v168 = vld [vmem:[%s2 + $0x328] sm:$0xff]
  %v169 = vld [vmem:[%s2 + $0x330] sm:$0xff]
  %v170 = vld [vmem:[%s2 + $0x338] sm:$0xff]
  %v171 = vld [vmem:[%s2 + $0x340] sm:$0xff]
  %vm172 = vcmask 982016
  %v174 = vsel %vm172, %v52, 0
  %v177 = vsel %vm172, %v53, 0
  %v180 = vsel %vm172, %v54, 0
  %v183 = vsel %vm172, %v55, 0
  %v186 = vsel %vm172, %v56, 0
  %v189 = vsel %vm172, %v57, 0
  %v192 = vsel %vm172, %v58, 0
  %v195 = vsel %vm172, %v59, 0
  %v198 = vsel %vm172, %v60, 0
  %v201 = vsel %vm172, %v61, 0
  %v204 = vsel %vm172, %v62, 0
  %v207 = vsel %vm172, %v63, 0
  %v210 = vsel %vm172, %v64, 0
  %v213 = vsel %vm172, %v65, 0
  %v216 = vsel %vm172, %v66, 0
  %218 = vmatpush.msra.mxu0 0.0
  %219 = vmatpush.msra.mxu0 %v165
  %220 = vmatpush.msra.mxu0 %v158
  %221 = vmatpush.msra.mxu0 %v151
  %222 = vmatpush.msra.mxu0 %v144
  %223 = vmatpush.msra.mxu0 %v137
  %224 = vmatpush.msra.mxu0 %v130
  %225 = vmatpush.msra.mxu0 %v123
  %226 = vmatpush.msra.mxu0 %v116
  %227 = vmatpush.msra.mxu0 %v109
  %228 = vmatpush.msra.mxu0 %v102
  %229 = vmatpush.msra.mxu0 %v95
  %230 = vmatpush.msra.mxu0 %v88
  %231 = vmatpush.msra.mxu0 %v81
  %232 = vmatpush.msra.mxu0 %v74
  %233 = vmatpush.msra.mxu0 %v67
  %234 = vmatmul.f32.gmra.mxu0 %v174
  %v235 = vpop.f32.mrf.mxu0
  %v236 = vadd.f32 0.0, %v235
  %237 = vmatmul.f32.gmra.mxu0 %v177
  %v238 = vpop.f32.mrf.mxu0
  %v239 = vadd.f32 0.0, %v238
  %240 = vmatmul.f32.gmra.mxu0 %v180
  %v241 = vpop.f32.mrf.mxu0
  %v242 = vadd.f32 0.0, %v241
  %243 = vmatmul.f32.gmra.mxu0 %v183
  %v244 = vpop.f32.mrf.mxu0
  %v245 = vadd.f32 0.0, %v244
  %246 = vmatmul.f32.gmra.mxu0 %v186
  %v247 = vpop.f32.mrf.mxu0
  %v248 = vadd.f32 0.0, %v247
  %249 = vmatmul.f32.gmra.mxu0 %v189
  %v250 = vpop.f32.mrf.mxu0
  %v251 = vadd.f32 0.0, %v250
  %252 = vmatmul.f32.gmra.mxu0 %v192
  %v253 = vpop.f32.mrf.mxu0
  %v254 = vadd.f32 0.0, %v253
  %255 = vmatmul.f32.gmra.mxu0 %v195
  %v256 = vpop.f32.mrf.mxu0
  %v257 = vadd.f32 0.0, %v256
  %258 = vmatmul.f32.gmra.mxu0 %v198
  %v259 = vpop.f32.mrf.mxu0
  %v260 = vadd.f32 0.0, %v259
  %261 = vmatmul.f32.gmra.mxu0 %v201
  %v262 = vpop.f32.mrf.mxu0
  %v263 = vadd.f32 0.0, %v262
  %264 = vmatmul.f32.gmra.mxu0 %v204
  %v265 = vpop.f32.mrf.mxu0
  %v266 = vadd.f32 0.0, %v265
  %267 = vmatmul.f32.gmra.mxu0 %v207
  %v268 = vpop.f32.mrf.mxu0
  %v269 = vadd.f32 0.0, %v268
  %270 = vmatmul.f32.gmra.mxu0 %v210
  %v271 = vpop.f32.mrf.mxu0
  %v272 = vadd.f32 0.0, %v271
  %273 = vmatmul.f32.gmra.mxu0 %v213
  %v274 = vpop.f32.mrf.mxu0
  %v275 = vadd.f32 0.0, %v274
  %276 = vmatmul.f32.gmra.mxu0 %v216
  %v277 = vpop.f32.mrf.mxu0
  %v278 = vadd.f32 0.0, %v277
  %279 = vdwg.mxu0
  %280 = vmatpush.msra.mxu0 0.0
  %281 = vmatpush.msra.mxu0 %v166
  %282 = vmatpush.msra.mxu0 %v159
  %283 = vmatpush.msra.mxu0 %v152
  %284 = vmatpush.msra.mxu0 %v145
  %285 = vmatpush.msra.mxu0 %v138
  %286 = vmatpush.msra.mxu0 %v131
  %287 = vmatpush.msra.mxu0 %v124
  %288 = vmatpush.msra.mxu0 %v117
  %289 = vmatpush.msra.mxu0 %v110
  %290 = vmatpush.msra.mxu0 %v103
  %291 = vmatpush.msra.mxu0 %v96
  %292 = vmatpush.msra.mxu0 %v89
  %293 = vmatpush.msra.mxu0 %v82
  %294 = vmatpush.msra.mxu0 %v75
  %295 = vmatpush.msra.mxu0 %v68
  %296 = vmatmul.f32.gmra.mxu0 %v174
  %v297 = vpop.f32.mrf.mxu0
  %v298 = vadd.f32 0.0, %v297
  %299 = vmatmul.f32.gmra.mxu0 %v177
  %v300 = vpop.f32.mrf.mxu0
  %v301 = vadd.f32 0.0, %v300
  %302 = vmatmul.f32.gmra.mxu0 %v180
  %v303 = vpop.f32.mrf.mxu0
  %v304 = vadd.f32 0.0, %v303
  %305 = vmatmul.f32.gmra.mxu0 %v183
  %v306 = vpop.f32.mrf.mxu0
  %v307 = vadd.f32 0.0, %v306
  %308 = vmatmul.f32.gmra.mxu0 %v186
  %v309 = vpop.f32.mrf.mxu0
  %v310 = vadd.f32 0.0, %v309
  %311 = vmatmul.f32.gmra.mxu0 %v189
  %v312 = vpop.f32.mrf.mxu0
  %v313 = vadd.f32 0.0, %v312
  %314 = vmatmul.f32.gmra.mxu0 %v192
  %v315 = vpop.f32.mrf.mxu0
  %v316 = vadd.f32 0.0, %v315
  %317 = vmatmul.f32.gmra.mxu0 %v195
  %v318 = vpop.f32.mrf.mxu0
  %v319 = vadd.f32 0.0, %v318
  %320 = vmatmul.f32.gmra.mxu0 %v198
  %v321 = vpop.f32.mrf.mxu0
  %v322 = vadd.f32 0.0, %v321
  %323 = vmatmul.f32.gmra.mxu0 %v201
  %v324 = vpop.f32.mrf.mxu0
  %v325 = vadd.f32 0.0, %v324
  %326 = vmatmul.f32.gmra.mxu0 %v204
  %v327 = vpop.f32.mrf.mxu0
  %v328 = vadd.f32 0.0, %v327
  %329 = vmatmul.f32.gmra.mxu0 %v207
  %v330 = vpop.f32.mrf.mxu0
  %v331 = vadd.f32 0.0, %v330
  %332 = vmatmul.f32.gmra.mxu0 %v210
  %v333 = vpop.f32.mrf.mxu0
  %v334 = vadd.f32 0.0, %v333
  %335 = vmatmul.f32.gmra.mxu0 %v213
  %v336 = vpop.f32.mrf.mxu0
  %v337 = vadd.f32 0.0, %v336
  %338 = vmatmul.f32.gmra.mxu0 %v216
  %v339 = vpop.f32.mrf.mxu0
  %v340 = vadd.f32 0.0, %v339
  %341 = vdwg.mxu0
  %342 = vmatpush.msra.mxu0 0.0
  %343 = vmatpush.msra.mxu0 %v167
  %344 = vmatpush.msra.mxu0 %v160
  %345 = vmatpush.msra.mxu0 %v153
  %346 = vmatpush.msra.mxu0 %v146
  %347 = vmatpush.msra.mxu0 %v139
  %348 = vmatpush.msra.mxu0 %v132
  %349 = vmatpush.msra.mxu0 %v125
  %350 = vmatpush.msra.mxu0 %v118
  %351 = vmatpush.msra.mxu0 %v111
  %352 = vmatpush.msra.mxu0 %v104
  %353 = vmatpush.msra.mxu0 %v97
  %354 = vmatpush.msra.mxu0 %v90
  %355 = vmatpush.msra.mxu0 %v83
  %356 = vmatpush.msra.mxu0 %v76
  %357 = vmatpush.msra.mxu0 %v69
  %358 = vmatmul.f32.gmra.mxu0 %v174
  %v359 = vpop.f32.mrf.mxu0
  %v360 = vadd.f32 0.0, %v359
  %361 = vmatmul.f32.gmra.mxu0 %v177
  %v362 = vpop.f32.mrf.mxu0
  %v363 = vadd.f32 0.0, %v362
  %364 = vmatmul.f32.gmra.mxu0 %v180
  %v365 = vpop.f32.mrf.mxu0
  %v366 = vadd.f32 0.0, %v365
  %367 = vmatmul.f32.gmra.mxu0 %v183
  %v368 = vpop.f32.mrf.mxu0
  %v369 = vadd.f32 0.0, %v368
  %370 = vmatmul.f32.gmra.mxu0 %v186
  %v371 = vpop.f32.mrf.mxu0
  %v372 = vadd.f32 0.0, %v371
  %373 = vmatmul.f32.gmra.mxu0 %v189
  %v374 = vpop.f32.mrf.mxu0
  %v375 = vadd.f32 0.0, %v374
  %376 = vmatmul.f32.gmra.mxu0 %v192
  %v377 = vpop.f32.mrf.mxu0
  %v378 = vadd.f32 0.0, %v377
  %379 = vmatmul.f32.gmra.mxu0 %v195
  %v380 = vpop.f32.mrf.mxu0
  %v381 = vadd.f32 0.0, %v380
  %382 = vmatmul.f32.gmra.mxu0 %v198
  %v383 = vpop.f32.mrf.mxu0
  %v384 = vadd.f32 0.0, %v383
  %385 = vmatmul.f32.gmra.mxu0 %v201
  %v386 = vpop.f32.mrf.mxu0
  %v387 = vadd.f32 0.0, %v386
  %388 = vmatmul.f32.gmra.mxu0 %v204
  %v389 = vpop.f32.mrf.mxu0
  %v390 = vadd.f32 0.0, %v389
  %391 = vmatmul.f32.gmra.mxu0 %v207
  %v392 = vpop.f32.mrf.mxu0
  %v393 = vadd.f32 0.0, %v392
  %394 = vmatmul.f32.gmra.mxu0 %v210
  %v395 = vpop.f32.mrf.mxu0
  %v396 = vadd.f32 0.0, %v395
  %397 = vmatmul.f32.gmra.mxu0 %v213
  %v398 = vpop.f32.mrf.mxu0
  %v399 = vadd.f32 0.0, %v398
  %400 = vmatmul.f32.gmra.mxu0 %v216
  %v401 = vpop.f32.mrf.mxu0
  %v402 = vadd.f32 0.0, %v401
  %403 = vdwg.mxu0
  %404 = vmatpush.msra.mxu0 0.0
  %405 = vmatpush.msra.mxu0 %v168
  %406 = vmatpush.msra.mxu0 %v161
  %407 = vmatpush.msra.mxu0 %v154
  %408 = vmatpush.msra.mxu0 %v147
  %409 = vmatpush.msra.mxu0 %v140
  %410 = vmatpush.msra.mxu0 %v133
  %411 = vmatpush.msra.mxu0 %v126
  %412 = vmatpush.msra.mxu0 %v119
  %413 = vmatpush.msra.mxu0 %v112
  %414 = vmatpush.msra.mxu0 %v105
  %415 = vmatpush.msra.mxu0 %v98
  %416 = vmatpush.msra.mxu0 %v91
  %417 = vmatpush.msra.mxu0 %v84
  %418 = vmatpush.msra.mxu0 %v77
  %419 = vmatpush.msra.mxu0 %v70
  %420 = vmatmul.f32.gmra.mxu0 %v174
  %v421 = vpop.f32.mrf.mxu0
  %v422 = vadd.f32 0.0, %v421
  %423 = vmatmul.f32.gmra.mxu0 %v177
  %v424 = vpop.f32.mrf.mxu0
  %v425 = vadd.f32 0.0, %v424
  %426 = vmatmul.f32.gmra.mxu0 %v180
  %v427 = vpop.f32.mrf.mxu0
  %v428 = vadd.f32 0.0, %v427
  %429 = vmatmul.f32.gmra.mxu0 %v183
  %v430 = vpop.f32.mrf.mxu0
  %v431 = vadd.f32 0.0, %v430
  %432 = vmatmul.f32.gmra.mxu0 %v186
  %v433 = vpop.f32.mrf.mxu0
  %v434 = vadd.f32 0.0, %v433
  %435 = vmatmul.f32.gmra.mxu0 %v189
  %v436 = vpop.f32.mrf.mxu0
  %v437 = vadd.f32 0.0, %v436
  %438 = vmatmul.f32.gmra.mxu0 %v192
  %v439 = vpop.f32.mrf.mxu0
  %v440 = vadd.f32 0.0, %v439
  %441 = vmatmul.f32.gmra.mxu0 %v195
  %v442 = vpop.f32.mrf.mxu0
  %v443 = vadd.f32 0.0, %v442
  %444 = vmatmul.f32.gmra.mxu0 %v198
  %v445 = vpop.f32.mrf.mxu0
  %v446 = vadd.f32 0.0, %v445
  %447 = vmatmul.f32.gmra.mxu0 %v201
  %v448 = vpop.f32.mrf.mxu0
  %v449 = vadd.f32 0.0, %v448
  %450 = vmatmul.f32.gmra.mxu0 %v204
  %v451 = vpop.f32.mrf.mxu0
  %v452 = vadd.f32 0.0, %v451
  %453 = vmatmul.f32.gmra.mxu0 %v207
  %v454 = vpop.f32.mrf.mxu0
  %v455 = vadd.f32 0.0, %v454
  %456 = vmatmul.f32.gmra.mxu0 %v210
  %v457 = vpop.f32.mrf.mxu0
  %v458 = vadd.f32 0.0, %v457
  %459 = vmatmul.f32.gmra.mxu0 %v213
  %v460 = vpop.f32.mrf.mxu0
  %v461 = vadd.f32 0.0, %v460
  %462 = vmatmul.f32.gmra.mxu0 %v216
  %v463 = vpop.f32.mrf.mxu0
  %v464 = vadd.f32 0.0, %v463
  %465 = vdwg.mxu0
  %466 = vmatpush.msra.mxu0 0.0
  %467 = vmatpush.msra.mxu0 %v169
  %468 = vmatpush.msra.mxu0 %v162
  %469 = vmatpush.msra.mxu0 %v155
  %470 = vmatpush.msra.mxu0 %v148
  %471 = vmatpush.msra.mxu0 %v141
  %472 = vmatpush.msra.mxu0 %v134
  %473 = vmatpush.msra.mxu0 %v127
  %474 = vmatpush.msra.mxu0 %v120
  %475 = vmatpush.msra.mxu0 %v113
  %476 = vmatpush.msra.mxu0 %v106
  %477 = vmatpush.msra.mxu0 %v99
  %478 = vmatpush.msra.mxu0 %v92
  %479 = vmatpush.msra.mxu0 %v85
  %480 = vmatpush.msra.mxu0 %v78
  %481 = vmatpush.msra.mxu0 %v71
  %482 = vmatmul.f32.gmra.mxu0 %v174
  %v483 = vpop.f32.mrf.mxu0
  %v484 = vadd.f32 0.0, %v483
  %485 = vmatmul.f32.gmra.mxu0 %v177
  %v486 = vpop.f32.mrf.mxu0
  %v487 = vadd.f32 0.0, %v486
  %488 = vmatmul.f32.gmra.mxu0 %v180
  %v489 = vpop.f32.mrf.mxu0
  %v490 = vadd.f32 0.0, %v489
  %491 = vmatmul.f32.gmra.mxu0 %v183
  %v492 = vpop.f32.mrf.mxu0
  %v493 = vadd.f32 0.0, %v492
  %494 = vmatmul.f32.gmra.mxu0 %v186
  %v495 = vpop.f32.mrf.mxu0
  %v496 = vadd.f32 0.0, %v495
  %497 = vmatmul.f32.gmra.mxu0 %v189
  %v498 = vpop.f32.mrf.mxu0
  %v499 = vadd.f32 0.0, %v498
  %500 = vmatmul.f32.gmra.mxu0 %v192
  %v501 = vpop.f32.mrf.mxu0
  %v502 = vadd.f32 0.0, %v501
  %503 = vmatmul.f32.gmra.mxu0 %v195
  %v504 = vpop.f32.mrf.mxu0
  %v505 = vadd.f32 0.0, %v504
  %506 = vmatmul.f32.gmra.mxu0 %v198
  %v507 = vpop.f32.mrf.mxu0
  %v508 = vadd.f32 0.0, %v507
  %509 = vmatmul.f32.gmra.mxu0 %v201
  %v510 = vpop.f32.mrf.mxu0
  %v511 = vadd.f32 0.0, %v510
  %512 = vmatmul.f32.gmra.mxu0 %v204
  %v513 = vpop.f32.mrf.mxu0
  %v514 = vadd.f32 0.0, %v513
  %515 = vmatmul.f32.gmra.mxu0 %v207
  %v516 = vpop.f32.mrf.mxu0
  %v517 = vadd.f32 0.0, %v516
  %518 = vmatmul.f32.gmra.mxu0 %v210
  %v519 = vpop.f32.mrf.mxu0
  %v520 = vadd.f32 0.0, %v519
  %521 = vmatmul.f32.gmra.mxu0 %v213
  %v522 = vpop.f32.mrf.mxu0
  %v523 = vadd.f32 0.0, %v522
  %524 = vmatmul.f32.gmra.mxu0 %v216
  %v525 = vpop.f32.mrf.mxu0
  %v526 = vadd.f32 0.0, %v525
  %527 = vdwg.mxu0
  %528 = vmatpush.msra.mxu0 0.0
  %529 = vmatpush.msra.mxu0 %v170
  %530 = vmatpush.msra.mxu0 %v163
  %531 = vmatpush.msra.mxu0 %v156
  %532 = vmatpush.msra.mxu0 %v149
  %533 = vmatpush.msra.mxu0 %v142
  %534 = vmatpush.msra.mxu0 %v135
  %535 = vmatpush.msra.mxu0 %v128
  %536 = vmatpush.msra.mxu0 %v121
  %537 = vmatpush.msra.mxu0 %v114
  %538 = vmatpush.msra.mxu0 %v107
  %539 = vmatpush.msra.mxu0 %v100
  %540 = vmatpush.msra.mxu0 %v93
  %541 = vmatpush.msra.mxu0 %v86
  %542 = vmatpush.msra.mxu0 %v79
  %543 = vmatpush.msra.mxu0 %v72
  %544 = vmatmul.f32.gmra.mxu0 %v174
  %v545 = vpop.f32.mrf.mxu0
  %v546 = vadd.f32 0.0, %v545
  %547 = vmatmul.f32.gmra.mxu0 %v177
  %v548 = vpop.f32.mrf.mxu0
  %v549 = vadd.f32 0.0, %v548
  %550 = vmatmul.f32.gmra.mxu0 %v180
  %v551 = vpop.f32.mrf.mxu0
  %v552 = vadd.f32 0.0, %v551
  %553 = vmatmul.f32.gmra.mxu0 %v183
  %v554 = vpop.f32.mrf.mxu0
  %v555 = vadd.f32 0.0, %v554
  %556 = vmatmul.f32.gmra.mxu0 %v186
  %v557 = vpop.f32.mrf.mxu0
  %v558 = vadd.f32 0.0, %v557
  %559 = vmatmul.f32.gmra.mxu0 %v189
  %v560 = vpop.f32.mrf.mxu0
  %v561 = vadd.f32 0.0, %v560
  %562 = vmatmul.f32.gmra.mxu0 %v192
  %v563 = vpop.f32.mrf.mxu0
  %v564 = vadd.f32 0.0, %v563
  %565 = vmatmul.f32.gmra.mxu0 %v195
  %v566 = vpop.f32.mrf.mxu0
  %v567 = vadd.f32 0.0, %v566
  %568 = vmatmul.f32.gmra.mxu0 %v198
  %v569 = vpop.f32.mrf.mxu0
  %v570 = vadd.f32 0.0, %v569
  %571 = vmatmul.f32.gmra.mxu0 %v201
  %v572 = vpop.f32.mrf.mxu0
  %v573 = vadd.f32 0.0, %v572
  %574 = vmatmul.f32.gmra.mxu0 %v204
  %v575 = vpop.f32.mrf.mxu0
  %v576 = vadd.f32 0.0, %v575
  %577 = vmatmul.f32.gmra.mxu0 %v207
  %v578 = vpop.f32.mrf.mxu0
  %v579 = vadd.f32 0.0, %v578
  %580 = vmatmul.f32.gmra.mxu0 %v210
  %v581 = vpop.f32.mrf.mxu0
  %v582 = vadd.f32 0.0, %v581
  %583 = vmatmul.f32.gmra.mxu0 %v213
  %v584 = vpop.f32.mrf.mxu0
  %v585 = vadd.f32 0.0, %v584
  %586 = vmatmul.f32.gmra.mxu0 %v216
  %v587 = vpop.f32.mrf.mxu0
  %v588 = vadd.f32 0.0, %v587
  %589 = vdwg.mxu0
  %590 = vmatpush.msra.mxu0 0.0
  %591 = vmatpush.msra.mxu0 %v171
  %592 = vmatpush.msra.mxu0 %v164
  %593 = vmatpush.msra.mxu0 %v157
  %594 = vmatpush.msra.mxu0 %v150
  %595 = vmatpush.msra.mxu0 %v143
  %596 = vmatpush.msra.mxu0 %v136
  %597 = vmatpush.msra.mxu0 %v129
  %598 = vmatpush.msra.mxu0 %v122
  %599 = vmatpush.msra.mxu0 %v115
  %600 = vmatpush.msra.mxu0 %v108
  %601 = vmatpush.msra.mxu0 %v101
  %602 = vmatpush.msra.mxu0 %v94
  %603 = vmatpush.msra.mxu0 %v87
  %604 = vmatpush.msra.mxu0 %v80
  %605 = vmatpush.msra.mxu0 %v73
  %606 = vmatmul.f32.gmra.mxu0 %v174
  %v607 = vpop.f32.mrf.mxu0
  %v608 = vadd.f32 0.0, %v607
  %609 = vmatmul.f32.gmra.mxu0 %v177
  %v610 = vpop.f32.mrf.mxu0
  %v611 = vadd.f32 0.0, %v610
  %612 = vmatmul.f32.gmra.mxu0 %v180
  %v613 = vpop.f32.mrf.mxu0
  %v614 = vadd.f32 0.0, %v613
  %615 = vmatmul.f32.gmra.mxu0 %v183
  %v616 = vpop.f32.mrf.mxu0
  %v617 = vadd.f32 0.0, %v616
  %618 = vmatmul.f32.gmra.mxu0 %v186
  %v619 = vpop.f32.mrf.mxu0
  %v620 = vadd.f32 0.0, %v619
  %621 = vmatmul.f32.gmra.mxu0 %v189
  %v622 = vpop.f32.mrf.mxu0
  %v623 = vadd.f32 0.0, %v622
  %624 = vmatmul.f32.gmra.mxu0 %v192
  %v625 = vpop.f32.mrf.mxu0
  %v626 = vadd.f32 0.0, %v625
  %627 = vmatmul.f32.gmra.mxu0 %v195
  %v628 = vpop.f32.mrf.mxu0
  %v629 = vadd.f32 0.0, %v628
  %630 = vmatmul.f32.gmra.mxu0 %v198
  %v631 = vpop.f32.mrf.mxu0
  %v632 = vadd.f32 0.0, %v631
  %633 = vmatmul.f32.gmra.mxu0 %v201
  %v634 = vpop.f32.mrf.mxu0
  %v635 = vadd.f32 0.0, %v634
  %636 = vmatmul.f32.gmra.mxu0 %v204
  %v637 = vpop.f32.mrf.mxu0
  %v638 = vadd.f32 0.0, %v637
  %639 = vmatmul.f32.gmra.mxu0 %v207
  %v640 = vpop.f32.mrf.mxu0
  %v641 = vadd.f32 0.0, %v640
  %642 = vmatmul.f32.gmra.mxu0 %v210
  %v643 = vpop.f32.mrf.mxu0
  %v644 = vadd.f32 0.0, %v643
  %645 = vmatmul.f32.gmra.mxu0 %v213
  %v646 = vpop.f32.mrf.mxu0
  %v647 = vadd.f32 0.0, %v646
  %648 = vmatmul.f32.gmra.mxu0 %v216
  %v649 = vpop.f32.mrf.mxu0
  %v650 = vadd.f32 0.0, %v649
  %651 = vdwg.mxu0
  %652 = vst [vmem:[%s3] sm:$0xff] %v236
  %653 = vst [vmem:[%s3 + $0x8] sm:$0xff] %v298
  %654 = vst [vmem:[%s3 + $0x10] sm:$0xff] %v360
  %655 = vst [vmem:[%s3 + $0x18] sm:$0xff] %v422
  %656 = vst [vmem:[%s3 + $0x20] sm:$0xff] %v484
  %657 = vst [vmem:[%s3 + $0x28] sm:$0xff] %v546
  %vm658 = vcmask 130048
  %659 = vst.msk [vmem:[%s3 + $0x30] sm:$0xff] %vm658, %v608
  %660 = vst [vmem:[%s3 + $0x38] sm:$0xff] %v239
  %661 = vst [vmem:[%s3 + $0x40] sm:$0xff] %v301
  %662 = vst [vmem:[%s3 + $0x48] sm:$0xff] %v363
  %663 = vst [vmem:[%s3 + $0x50] sm:$0xff] %v425
  %664 = vst [vmem:[%s3 + $0x58] sm:$0xff] %v487
  %665 = vst [vmem:[%s3 + $0x60] sm:$0xff] %v549
  %666 = vst.msk [vmem:[%s3 + $0x68] sm:$0xff] %vm658, %v611
  %667 = vst [vmem:[%s3 + $0x70] sm:$0xff] %v242
  %668 = vst [vmem:[%s3 + $0x78] sm:$0xff] %v304
  %669 = vst [vmem:[%s3 + $0x80] sm:$0xff] %v366
  %670 = vst [vmem:[%s3 + $0x88] sm:$0xff] %v428
  %671 = vst [vmem:[%s3 + $0x90] sm:$0xff] %v490
  %672 = vst [vmem:[%s3 + $0x98] sm:$0xff] %v552
  %673 = vst.msk [vmem:[%s3 + $0xa0] sm:$0xff] %vm658, %v614
  %674 = vst [vmem:[%s3 + $0xa8] sm:$0xff] %v245
  %675 = vst [vmem:[%s3 + $0xb0] sm:$0xff] %v307
  %676 = vst [vmem:[%s3 + $0xb8] sm:$0xff] %v369
  %677 = vst [vmem:[%s3 + $0xc0] sm:$0xff] %v431
  %678 = vst [vmem:[%s3 + $0xc8] sm:$0xff] %v493
  %679 = vst [vmem:[%s3 + $0xd0] sm:$0xff] %v555
  %680 = vst.msk [vmem:[%s3 + $0xd8] sm:$0xff] %vm658, %v617
  %681 = vst [vmem:[%s3 + $0xe0] sm:$0xff] %v248
  %682 = vst [vmem:[%s3 + $0xe8] sm:$0xff] %v310
  %683 = vst [vmem:[%s3 + $0xf0] sm:$0xff] %v372
  %684 = vst [vmem:[%s3 + $0xf8] sm:$0xff] %v434
  %685 = vst [vmem:[%s3 + $0x100] sm:$0xff] %v496
  %686 = vst [vmem:[%s3 + $0x108] sm:$0xff] %v558
  %687 = vst.msk [vmem:[%s3 + $0x110] sm:$0xff] %vm658, %v620
  %688 = vst [vmem:[%s3 + $0x118] sm:$0xff] %v251
  %689 = vst [vmem:[%s3 + $0x120] sm:$0xff] %v313
  %690 = vst [vmem:[%s3 + $0x128] sm:$0xff] %v375
  %691 = vst [vmem:[%s3 + $0x130] sm:$0xff] %v437
  %692 = vst [vmem:[%s3 + $0x138] sm:$0xff] %v499
  %693 = vst [vmem:[%s3 + $0x140] sm:$0xff] %v561
  %694 = vst.msk [vmem:[%s3 + $0x148] sm:$0xff] %vm658, %v623
  %695 = vst [vmem:[%s3 + $0x150] sm:$0xff] %v254
  %696 = vst [vmem:[%s3 + $0x158] sm:$0xff] %v316
  %697 = vst [vmem:[%s3 + $0x160] sm:$0xff] %v378
  %698 = vst [vmem:[%s3 + $0x168] sm:$0xff] %v440
  %699 = vst [vmem:[%s3 + $0x170] sm:$0xff] %v502
  %700 = vst [vmem:[%s3 + $0x178] sm:$0xff] %v564
  %701 = vst.msk [vmem:[%s3 + $0x180] sm:$0xff] %vm658, %v626
  %702 = vst [vmem:[%s3 + $0x188] sm:$0xff] %v257
  %703 = vst [vmem:[%s3 + $0x190] sm:$0xff] %v319
  %704 = vst [vmem:[%s3 + $0x198] sm:$0xff] %v381
  %705 = vst [vmem:[%s3 + $0x1a0] sm:$0xff] %v443
  %706 = vst [vmem:[%s3 + $0x1a8] sm:$0xff] %v505
  %707 = vst [vmem:[%s3 + $0x1b0] sm:$0xff] %v567
  %708 = vst.msk [vmem:[%s3 + $0x1b8] sm:$0xff] %vm658, %v629
  %709 = vst [vmem:[%s3 + $0x1c0] sm:$0xff] %v260
  %710 = vst [vmem:[%s3 + $0x1c8] sm:$0xff] %v322
  %711 = vst [vmem:[%s3 + $0x1d0] sm:$0xff] %v384
  %712 = vst [vmem:[%s3 + $0x1d8] sm:$0xff] %v446
  %713 = vst [vmem:[%s3 + $0x1e0] sm:$0xff] %v508
  %714 = vst [vmem:[%s3 + $0x1e8] sm:$0xff] %v570
  %715 = vst.msk [vmem:[%s3 + $0x1f0] sm:$0xff] %vm658, %v632
  %716 = vst [vmem:[%s3 + $0x1f8] sm:$0xff] %v263
  %717 = vst [vmem:[%s3 + $0x200] sm:$0xff] %v325
  %718 = vst [vmem:[%s3 + $0x208] sm:$0xff] %v387
  %719 = vst [vmem:[%s3 + $0x210] sm:$0xff] %v449
  %720 = vst [vmem:[%s3 + $0x218] sm:$0xff] %v511
  %721 = vst [vmem:[%s3 + $0x220] sm:$0xff] %v573
  %722 = vst.msk [vmem:[%s3 + $0x228] sm:$0xff] %vm658, %v635
  %723 = vst [vmem:[%s3 + $0x230] sm:$0xff] %v266
  %724 = vst [vmem:[%s3 + $0x238] sm:$0xff] %v328
  %725 = vst [vmem:[%s3 + $0x240] sm:$0xff] %v390
  %726 = vst [vmem:[%s3 + $0x248] sm:$0xff] %v452
  %727 = vst [vmem:[%s3 + $0x250] sm:$0xff] %v514
  %728 = vst [vmem:[%s3 + $0x258] sm:$0xff] %v576
  %729 = vst.msk [vmem:[%s3 + $0x260] sm:$0xff] %vm658, %v638
  %730 = vst [vmem:[%s3 + $0x268] sm:$0xff] %v269
  %731 = vst [vmem:[%s3 + $0x270] sm:$0xff] %v331
  %732 = vst [vmem:[%s3 + $0x278] sm:$0xff] %v393
  %733 = vst [vmem:[%s3 + $0x280] sm:$0xff] %v455
  %734 = vst [vmem:[%s3 + $0x288] sm:$0xff] %v517
  %735 = vst [vmem:[%s3 + $0x290] sm:$0xff] %v579
  %736 = vst.msk [vmem:[%s3 + $0x298] sm:$0xff] %vm658, %v641
  %737 = vst [vmem:[%s3 + $0x2a0] sm:$0xff] %v272
  %738 = vst [vmem:[%s3 + $0x2a8] sm:$0xff] %v334
  %739 = vst [vmem:[%s3 + $0x2b0] sm:$0xff] %v396
  %740 = vst [vmem:[%s3 + $0x2b8] sm:$0xff] %v458
  %741 = vst [vmem:[%s3 + $0x2c0] sm:$0xff] %v520
  %742 = vst [vmem:[%s3 + $0x2c8] sm:$0xff] %v582
  %743 = vst.msk [vmem:[%s3 + $0x2d0] sm:$0xff] %vm658, %v644
  %744 = vst [vmem:[%s3 + $0x2d8] sm:$0xff] %v275
  %745 = vst [vmem:[%s3 + $0x2e0] sm:$0xff] %v337
  %746 = vst [vmem:[%s3 + $0x2e8] sm:$0xff] %v399
  %747 = vst [vmem:[%s3 + $0x2f0] sm:$0xff] %v461
  %748 = vst [vmem:[%s3 + $0x2f8] sm:$0xff] %v523
  %749 = vst [vmem:[%s3 + $0x300] sm:$0xff] %v585
  %750 = vst.msk [vmem:[%s3 + $0x308] sm:$0xff] %vm658, %v647
  %751 = vst [vmem:[%s3 + $0x310] sm:$0xff] %v278
  %752 = vst [vmem:[%s3 + $0x318] sm:$0xff] %v340
  %753 = vst [vmem:[%s3 + $0x320] sm:$0xff] %v402
  %754 = vst [vmem:[%s3 + $0x328] sm:$0xff] %v464
  %755 = vst [vmem:[%s3 + $0x330] sm:$0xff] %v526
  %756 = vst [vmem:[%s3 + $0x338] sm:$0xff] %v588
  %757 = vst.msk [vmem:[%s3 + $0x340] sm:$0xff] %vm658, %v650
  // Predicated region
  $region14: #{tpu_custom_call.1} parent=0 // pred_check
    _
  $region15: #{tpu_custom_call.1} parent=0 // pred_check_branch
    %759 = sbr.rel (0) target = $region17
  $region16: #{tpu_custom_call.1} parent=0 // pred_region
    _
  $region17: #{tpu_custom_call.1} parent=0 // pred_fallthru
    _
  // Predicated region
  $region18: #{tpu_custom_call.1} parent=0 // pred_check
    _
  $region19: #{tpu_custom_call.1} parent=0 // pred_check_branch
    %761 = sbr.rel (0) target = $region21
  $region20: #{tpu_custom_call.1} parent=0 // pred_region
    _
  $region21: #{tpu_custom_call.1} parent=0 // pred_fallthru
    _

</llo_original>
